<compile_context>
chip_gen: v7x
topology: tpu7x:2x2x1
jax: 0.10.0
libtpu: 0.0.40
codegen_flags: <defaults>
</compile_context>

<pallas_src>
import jax
import jax.numpy as jnp
from jax.experimental import pallas as pl
from jax.experimental.pallas import tpu as pltpu


# ------------------------------ fused kernel ------------------------------- #

def _stack_kernel(xt_ref, mprev_ref, mnext_ref,
                  w1a_ref, b1a_ref, w1b_ref, b1b_ref, wh1_ref, bh1_ref,
                  w2a_ref, b2a_ref, w2b_ref, b2b_ref, wh2_ref, bh2_ref,
                  fore_ref, resid_ref):
    """Whole Stack (block_1 + block_2), whole batch, one grid step, all in VMEM.

    Activations are kept transposed as [C, B*L] (channels on sublanes, batch*time on
    lanes) so every conv is a single lane-dense MXU matmul over the folded batch.
    """
    B, L = resid_ref.shape
    mprev = mprev_ref[...]          # [1, B*L], 0 where l == 0     (per batch element)
    mnext = mnext_ref[...]          # [1, B*L], 0 where l == L - 1 (per batch element)

    def conv3_relu(ht, w_ref, b_ref):
        # Conv1d(k=3, stride=1, pad=1) on transposed activations ht [C, B*L]:
        # fused-tap matmul  [Cout, 3C] @ [3C, B*L]  (one MXU push per conv).
        C = ht.shape[0]
        zcol = jnp.zeros((C, 1), jnp.float32)
        # shift along lanes; masks zero the cross-batch / out-of-range taps
        h_prev = jnp.concatenate([zcol, ht[:, :-1]], axis=1) * mprev   # tap x[l-1]
        h_next = jnp.concatenate([ht[:, 1:], zcol], axis=1) * mnext    # tap x[l+1]
        stacked = jnp.concatenate([h_prev, ht, h_next], axis=0)        # [3C, B*L]
        out = jnp.dot(w_ref[...], stacked, preferred_element_type=jnp.float32)
        return jnp.maximum(out + b_ref[...], 0.0)                      # bias [Cout, 1]

    def basic_block(ht_in, wa_ref, ba_ref, wb_ref, bb_ref, wh_ref, bh_ref):
        h1 = conv3_relu(ht_in, wa_ref, ba_ref)                         # [c1, B*L]
        h2 = conv3_relu(h1, wb_ref, bb_ref)                            # [c2, B*L]
        c2 = h2.shape[0]
        # lane-dense NCW flatten: feat[b, c*L + l] = h2[c, b*L + l]  -> [B, c2*L]
        # (pure in-register slice/concat; no scratch, no column-vector stores)
        feat = jnp.concatenate(
            [jnp.concatenate([h2[c:c + 1, b * L:(b + 1) * L] for c in range(c2)], axis=1)
             for b in range(B)], axis=0)
        # merged backcast|forecast head, lane-dense output [B, L+F]
        head = jnp.dot(feat, wh_ref[...],
                       preferred_element_type=jnp.float32) + bh_ref[...]
        backcast = head[:, :L]                                         # [B, L]
        forecast = head[:, L:]                                         # [B, F]
        # backcast re-laid to the transposed [1, B*L] layout (feeds the next block)
        backcast_t = jnp.concatenate([backcast[b:b + 1, :] for b in range(B)], axis=1)
        return forecast, backcast, backcast_t

    xt = xt_ref[...]                                                   # [C_in, B*L]

    f1, _, bc1_t = basic_block(xt, w1a_ref, b1a_ref, w1b_ref, b1b_ref, wh1_ref, bh1_ref)
    r1_t = xt[0:1, :] - bc1_t                                          # block_2 input [1, B*L]
    f2, bc2, _ = basic_block(r1_t, w2a_ref, b2a_ref, w2b_ref, b2b_ref, wh2_ref, bh2_ref)

    # final residual back in [B, L] (lane-dense output layout)
    r1_std = jnp.concatenate([r1_t[:, b * L:(b + 1) * L] for b in range(B)], axis=0)
    fore_ref[...] = f1 + f2                                            # [B, F]
    resid_ref[...] = r1_std - bc2                                      # [B, L]


# ------------------------------ params / packing --------------------------- #

def init_basic_block_params(key, in_ch, enc_channels, est_len, fore_len):
    """PyTorch-layout parameters (Conv1d [out,in,k]; Linear [out,in])."""
    c1, c2 = enc_channels
    ks = jax.random.split(key, 8)
    s = 0.1
    return dict(
        w1=jax.random.normal(ks[0], (c1, in_ch, 3), jnp.float32) * s,
        b1=jax.random.normal(ks[1], (c1,), jnp.float32) * s,
        w2=jax.random.normal(ks[2], (c2, c1, 3), jnp.float32) * s,
        b2=jax.random.normal(ks[3], (c2,), jnp.float32) * s,
        wb=jax.random.normal(ks[4], (est_len, c2 * est_len), jnp.float32) * s,
        bb=jax.random.normal(ks[5], (est_len,), jnp.float32) * s,
        wf=jax.random.normal(ks[6], (fore_len, c2 * est_len), jnp.float32) * s,
        bf=jax.random.normal(ks[7], (fore_len,), jnp.float32) * s,
    )


def init_stack_params(key, input_size, enc_channels, input_seqlen, forecast_seqlen):
    k1, k2 = jax.random.split(key)
    return dict(
        block_1=init_basic_block_params(k1, input_size, enc_channels,
                                        input_seqlen, forecast_seqlen),
        block_2=init_basic_block_params(k2, 1, enc_channels,
                                        input_seqlen, forecast_seqlen),
    )


def pack_block_params(p):
    """One-time re-layout into matmul-ready kernel form (zero per-forward cost).

    * conv taps fused:  [Cout, Cin, 3] -> [Cout, 3*Cin], row-matching the in-kernel
      [h_prev ; h ; h_next] sublane stack (tap-major, channel-minor).
    * heads merged + transposed for a lane-dense output: [c2*L, L+F].
    """
    c1 = p["w1"].shape[0]
    c2 = p["w2"].shape[0]
    return dict(
        wa=jnp.transpose(p["w1"], (0, 2, 1)).reshape(c1, -1),            # [c1, 3*Cin]
        ba=p["b1"].reshape(-1, 1),                                       # [c1, 1]
        wb=jnp.transpose(p["w2"], (0, 2, 1)).reshape(c2, -1),            # [c2, 3*c1]
        bb=p["b2"].reshape(-1, 1),                                       # [c2, 1]
        wh=jnp.concatenate([p["wb"], p["wf"]], axis=0).T,                # [c2*L, L+F]
        bh=jnp.concatenate([p["bb"], p["bf"]], axis=0).reshape(1, -1),   # [1, L+F]
    )


def pack_stack_params(params):
    return dict(block_1=pack_block_params(params["block_1"]),
                block_2=pack_block_params(params["block_2"]))


# --------------------------------- forward --------------------------------- #

def stack_forward(packed, inputs):
    """inputs: [B, L, C_in] -> (forecast [B, F, 1], residual [B, L, 1])."""
    B, L, C_in = inputs.shape
    b1, b2 = packed["block_1"], packed["block_2"]
    F = b1["wh"].shape[1] - L
    BL = B * L

    # transposed, batch-folded layout for the kernel: x_t[c, b*L + l] = inputs[b, l, c]
    x_t = jnp.transpose(inputs.astype(jnp.float32), (2, 0, 1)).reshape(C_in, BL)
    # conv boundary masks (replace the old pad-buffer + its per-call zeroing)
    l_idx = jnp.arange(BL, dtype=jnp.int32) % L
    mprev = (l_idx != 0).astype(jnp.float32).reshape(1, BL)
    mnext = (l_idx != L - 1).astype(jnp.float32).reshape(1, BL)

    weights = (b1["wa"], b1["ba"], b1["wb"], b1["bb"], b1["wh"], b1["bh"],
               b2["wa"], b2["ba"], b2["wb"], b2["bb"], b2["wh"], b2["bh"])
    kernel_inputs = (x_t, mprev, mnext) + weights

    def whole(arr):   # whole array, VMEM-resident, single block
        nd = arr.ndim
        return pl.BlockSpec(arr.shape, lambda i, nd=nd: (0,) * nd)

    grid_spec = pltpu.PrefetchScalarGridSpec(
        num_scalar_prefetch=0,
        grid=(1,),                                    # whole batch in ONE grid step
        in_specs=[whole(a) for a in kernel_inputs],
        out_specs=[pl.BlockSpec((B, F), lambda i: (0, 0)),
                   pl.BlockSpec((B, L), lambda i: (0, 0))],
    )

    forecast2d, residual2d = pl.pallas_call(
        _stack_kernel,
        out_shape=(jax.ShapeDtypeStruct((B, F), jnp.float32),
                   jax.ShapeDtypeStruct((B, L), jnp.float32)),
        grid_spec=grid_spec,
        # single trivial step: deliberately no megacore split (working set is ~KBs,
        # per-core launch overhead on v7x would exceed the compute saved).
        compiler_params=pltpu.CompilerParams(dimension_semantics=("arbitrary",)),
    )(*kernel_inputs)

    # trailing singleton channel added outside the kernel (keeps HBM writes lane-dense)
    return forecast2d[..., None], residual2d[..., None]


# ------------------------ pure-JAX reference (check) ------------------------ #

def _ref_conv(x, w_pt, b_pt):
    L = x.shape[0]
    xp = jnp.pad(x, ((1, 1), (0, 0)))
    out = b_pt[None, :]
    for k in range(3):
        out = out + jnp.dot(xp[k:k + L, :], w_pt[:, :, k].T,
                            precision=jax.lax.Precision.HIGHEST)
    return jnp.maximum(out, 0.0)


def _ref_block(p, x):
    h1 = _ref_conv(x, p["w1"], p["b1"])
    h2 = _ref_conv(h1, p["w2"], p["b2"])
    feat = h2.T.reshape(-1)                               # NCW flatten of [c2, L]
    backcast = jnp.dot(p["wb"], feat, precision=jax.lax.Precision.HIGHEST) + p["bb"]
    forecast = jnp.dot(p["wf"], feat, precision=jax.lax.Precision.HIGHEST) + p["bf"]
    residual = x[:, 0] - backcast
    return forecast, residual


def _ref_stack(params, inputs):
    fs, rs = [], []
    for b in range(inputs.shape[0]):
        f1, r1 = _ref_block(params["block_1"], inputs[b])
        f2, r2 = _ref_block(params["block_2"], r1[:, None])
        fs.append(f1 + f2)
        rs.append(r2)
    return jnp.stack(fs)[..., None], jnp.stack(rs)[..., None]


# ----------------------------------- main ----------------------------------- #

if __name__ == "__main__":
    key = jax.random.PRNGKey(0)
    kx, kp = jax.random.split(key)

    # module defaults: input_size=3, encoder_channels=[4, 6],
    #                  input_seqlen=24, forecast_seqlen=6
    B, L, F, C_in = 2, 24, 6, 3
    enc_channels = [4, 6]

    inputs = jax.random.normal(kx, (B, L, C_in), jnp.float32)
    params = init_stack_params(kp, C_in, enc_channels, L, F)
    packed = pack_stack_params(params)      # one-time weight re-layout

    forecast, residual = stack_forward(packed, inputs)
    jax.block_until_ready((forecast, residual))

    assert forecast.shape == (B, F, 1), forecast.shape
    assert residual.shape == (B, L, 1), residual.shape
    assert forecast.dtype == jnp.float32 and residual.dtype == jnp.float32
    assert bool(jnp.all(jnp.isfinite(forecast))) and bool(jnp.all(jnp.isfinite(residual)))

    ref_f, ref_r = _ref_stack(params, inputs)
    assert bool(jnp.allclose(forecast, ref_f, atol=1e-2, rtol=1e-2)), "forecast mismatch"
    assert bool(jnp.allclose(residual, ref_r, atol=1e-2, rtol=1e-2)), "residual mismatch"

    print("KERNEL_OK")
</pallas_src>

<mosaic_0001>
module attributes {stable_mosaic.version = 11 : i64} {
  func.func @_stack_kernel(%arg0: i32, %arg1: memref<3x48xf32, #tpu.memory_space<vmem>>, %arg2: memref<1x48xf32, #tpu.memory_space<vmem>>, %arg3: memref<1x48xf32, #tpu.memory_space<vmem>>, %arg4: memref<4x9xf32, #tpu.memory_space<vmem>>, %arg5: memref<4x1xf32, #tpu.memory_space<vmem>>, %arg6: memref<6x12xf32, #tpu.memory_space<vmem>>, %arg7: memref<6x1xf32, #tpu.memory_space<vmem>>, %arg8: memref<144x30xf32, #tpu.memory_space<vmem>>, %arg9: memref<1x30xf32, #tpu.memory_space<vmem>>, %arg10: memref<4x3xf32, #tpu.memory_space<vmem>>, %arg11: memref<4x1xf32, #tpu.memory_space<vmem>>, %arg12: memref<6x12xf32, #tpu.memory_space<vmem>>, %arg13: memref<6x1xf32, #tpu.memory_space<vmem>>, %arg14: memref<144x30xf32, #tpu.memory_space<vmem>>, %arg15: memref<1x30xf32, #tpu.memory_space<vmem>>, %arg16: memref<2x6xf32, #tpu.memory_space<vmem>>, %arg17: memref<2x24xf32, #tpu.memory_space<vmem>>) attributes {dimension_semantics = [#tpu.dimension_semantics<arbitrary>], iteration_bounds = array<i64: 1>, scalar_prefetch = 0 : i64, scratch_operands = 0 : i64, tpu.core_type = #tpu.core_type<tc>, window_params = [{pipeline_mode = #tpu.pipeline_mode<synchronous>, transform_indices = @transform_0, window_bounds = array<i64: 3, 48>}, {pipeline_mode = #tpu.pipeline_mode<synchronous>, transform_indices = @transform_1, window_bounds = array<i64: 1, 48>}, {pipeline_mode = #tpu.pipeline_mode<synchronous>, transform_indices = @transform_2, window_bounds = array<i64: 1, 48>}, {pipeline_mode = #tpu.pipeline_mode<synchronous>, transform_indices = @transform_3, window_bounds = array<i64: 4, 9>}, {pipeline_mode = #tpu.pipeline_mode<synchronous>, transform_indices = @transform_4, window_bounds = array<i64: 4, 1>}, {pipeline_mode = #tpu.pipeline_mode<synchronous>, transform_indices = @transform_5, window_bounds = array<i64: 6, 12>}, {pipeline_mode = #tpu.pipeline_mode<synchronous>, transform_indices = @transform_6, window_bounds = array<i64: 6, 1>}, {pipeline_mode = #tpu.pipeline_mode<synchronous>, transform_indices = @transform_7, window_bounds = array<i64: 144, 30>}, {pipeline_mode = #tpu.pipeline_mode<synchronous>, transform_indices = @transform_8, window_bounds = array<i64: 1, 30>}, {pipeline_mode = #tpu.pipeline_mode<synchronous>, transform_indices = @transform_9, window_bounds = array<i64: 4, 3>}, {pipeline_mode = #tpu.pipeline_mode<synchronous>, transform_indices = @transform_10, window_bounds = array<i64: 4, 1>}, {pipeline_mode = #tpu.pipeline_mode<synchronous>, transform_indices = @transform_11, window_bounds = array<i64: 6, 12>}, {pipeline_mode = #tpu.pipeline_mode<synchronous>, transform_indices = @transform_12, window_bounds = array<i64: 6, 1>}, {pipeline_mode = #tpu.pipeline_mode<synchronous>, transform_indices = @transform_13, window_bounds = array<i64: 144, 30>}, {pipeline_mode = #tpu.pipeline_mode<synchronous>, transform_indices = @transform_14, window_bounds = array<i64: 1, 30>}, {pipeline_mode = #tpu.pipeline_mode<synchronous>, transform_indices = @transform_15, window_bounds = array<i64: 2, 6>}, {pipeline_mode = #tpu.pipeline_mode<synchronous>, transform_indices = @transform_16, window_bounds = array<i64: 2, 24>}]} {
    %c0 = arith.constant 0 : index
    %c0_0 = arith.constant 0 : index
    %0 = vector.load %arg2[%c0, %c0_0] : memref<1x48xf32, #tpu.memory_space<vmem>>, vector<1x48xf32>
    %c0_1 = arith.constant 0 : index
    %c0_2 = arith.constant 0 : index
    %1 = vector.load %arg3[%c0_1, %c0_2] : memref<1x48xf32, #tpu.memory_space<vmem>>, vector<1x48xf32>
    %c0_3 = arith.constant 0 : index
    %c0_4 = arith.constant 0 : index
    %2 = vector.load %arg1[%c0_3, %c0_4] : memref<3x48xf32, #tpu.memory_space<vmem>>, vector<3x48xf32>
    %cst = arith.constant 0.000000e+00 : f32
    %3 = vector.broadcast %cst : f32 to vector<3x1xf32>
    %4 = vector.extract_strided_slice %2 {offsets = [0, 0], sizes = [3, 47], strides = [1, 1]} : vector<3x48xf32> to vector<3x47xf32>
    %5 = tpu.concatenate %3, %4 in 1 : vector<3x1xf32>, vector<3x47xf32> -> vector<3x48xf32>
    %6 = vector.broadcast %0 : vector<1x48xf32> to vector<3x48xf32>
    %7 = arith.mulf %5, %6 : vector<3x48xf32>
    %8 = vector.extract_strided_slice %2 {offsets = [0, 1], sizes = [3, 47], strides = [1, 1]} : vector<3x48xf32> to vector<3x47xf32>
    %9 = tpu.concatenate %8, %3 in 1 : vector<3x47xf32>, vector<3x1xf32> -> vector<3x48xf32>
    %10 = vector.broadcast %1 : vector<1x48xf32> to vector<3x48xf32>
    %11 = arith.mulf %9, %10 : vector<3x48xf32>
    %12 = tpu.concatenate %7, %2, %11 in 0 : vector<3x48xf32>, vector<3x48xf32>, vector<3x48xf32> -> vector<9x48xf32>
    %c0_5 = arith.constant 0 : index
    %c0_6 = arith.constant 0 : index
    %13 = vector.load %arg4[%c0_5, %c0_6] : memref<4x9xf32, #tpu.memory_space<vmem>>, vector<4x9xf32>
    %cst_7 = arith.constant dense<0.000000e+00> : vector<4x48xf32>
    %14 = tpu.matmul %13, %12, %cst_7 {dimension_numbers = #tpu.dot_dimension_numbers<[1], [0], [0], [1], [0, 0, 1, 1], [], []>} : vector<4x9xf32>, vector<9x48xf32>, vector<4x48xf32> -> vector<4x48xf32>
    %c0_8 = arith.constant 0 : index
    %c0_9 = arith.constant 0 : index
    %15 = vector.load %arg5[%c0_8, %c0_9] : memref<4x1xf32, #tpu.memory_space<vmem>>, vector<4x1xf32>
    %16 = vector.broadcast %15 : vector<4x1xf32> to vector<4x48xf32>
    %17 = arith.addf %14, %16 : vector<4x48xf32>
    %cst_10 = arith.constant 0.000000e+00 : f32
    %18 = vector.broadcast %cst_10 : f32 to vector<4x48xf32>
    %19 = arith.maximumf %17, %18 : vector<4x48xf32>
    %cst_11 = arith.constant 0.000000e+00 : f32
    %20 = vector.broadcast %cst_11 : f32 to vector<4x1xf32>
    %21 = vector.extract_strided_slice %19 {offsets = [0, 0], sizes = [4, 47], strides = [1, 1]} : vector<4x48xf32> to vector<4x47xf32>
    %22 = tpu.concatenate %20, %21 in 1 : vector<4x1xf32>, vector<4x47xf32> -> vector<4x48xf32>
    %23 = vector.broadcast %0 : vector<1x48xf32> to vector<4x48xf32>
    %24 = arith.mulf %22, %23 : vector<4x48xf32>
    %25 = vector.extract_strided_slice %19 {offsets = [0, 1], sizes = [4, 47], strides = [1, 1]} : vector<4x48xf32> to vector<4x47xf32>
    %26 = tpu.concatenate %25, %20 in 1 : vector<4x47xf32>, vector<4x1xf32> -> vector<4x48xf32>
    %27 = vector.broadcast %1 : vector<1x48xf32> to vector<4x48xf32>
    %28 = arith.mulf %26, %27 : vector<4x48xf32>
    %29 = tpu.concatenate %24, %19, %28 in 0 : vector<4x48xf32>, vector<4x48xf32>, vector<4x48xf32> -> vector<12x48xf32>
    %c0_12 = arith.constant 0 : index
    %c0_13 = arith.constant 0 : index
    %30 = vector.load %arg6[%c0_12, %c0_13] : memref<6x12xf32, #tpu.memory_space<vmem>>, vector<6x12xf32>
    %cst_14 = arith.constant dense<0.000000e+00> : vector<6x48xf32>
    %31 = tpu.matmul %30, %29, %cst_14 {dimension_numbers = #tpu.dot_dimension_numbers<[1], [0], [0], [1], [0, 0, 1, 1], [], []>} : vector<6x12xf32>, vector<12x48xf32>, vector<6x48xf32> -> vector<6x48xf32>
    %c0_15 = arith.constant 0 : index
    %c0_16 = arith.constant 0 : index
    %32 = vector.load %arg7[%c0_15, %c0_16] : memref<6x1xf32, #tpu.memory_space<vmem>>, vector<6x1xf32>
    %33 = vector.broadcast %32 : vector<6x1xf32> to vector<6x48xf32>
    %34 = arith.addf %31, %33 : vector<6x48xf32>
    %cst_17 = arith.constant 0.000000e+00 : f32
    %35 = vector.broadcast %cst_17 : f32 to vector<6x48xf32>
    %36 = arith.maximumf %34, %35 : vector<6x48xf32>
    %37 = vector.extract_strided_slice %36 {offsets = [0, 0], sizes = [1, 24], strides = [1, 1]} : vector<6x48xf32> to vector<1x24xf32>
    %38 = vector.extract_strided_slice %36 {offsets = [1, 0], sizes = [1, 24], strides = [1, 1]} : vector<6x48xf32> to vector<1x24xf32>
    %39 = vector.extract_strided_slice %36 {offsets = [2, 0], sizes = [1, 24], strides = [1, 1]} : vector<6x48xf32> to vector<1x24xf32>
    %40 = vector.extract_strided_slice %36 {offsets = [3, 0], sizes = [1, 24], strides = [1, 1]} : vector<6x48xf32> to vector<1x24xf32>
    %41 = vector.extract_strided_slice %36 {offsets = [4, 0], sizes = [1, 24], strides = [1, 1]} : vector<6x48xf32> to vector<1x24xf32>
    %42 = vector.extract_strided_slice %36 {offsets = [5, 0], sizes = [1, 24], strides = [1, 1]} : vector<6x48xf32> to vector<1x24xf32>
    %43 = tpu.concatenate %37, %38, %39, %40, %41, %42 in 1 : vector<1x24xf32>, vector<1x24xf32>, vector<1x24xf32>, vector<1x24xf32>, vector<1x24xf32>, vector<1x24xf32> -> vector<1x144xf32>
    %44 = vector.extract_strided_slice %36 {offsets = [0, 24], sizes = [1, 24], strides = [1, 1]} : vector<6x48xf32> to vector<1x24xf32>
    %45 = vector.extract_strided_slice %36 {offsets = [1, 24], sizes = [1, 24], strides = [1, 1]} : vector<6x48xf32> to vector<1x24xf32>
    %46 = vector.extract_strided_slice %36 {offsets = [2, 24], sizes = [1, 24], strides = [1, 1]} : vector<6x48xf32> to vector<1x24xf32>
    %47 = vector.extract_strided_slice %36 {offsets = [3, 24], sizes = [1, 24], strides = [1, 1]} : vector<6x48xf32> to vector<1x24xf32>
    %48 = vector.extract_strided_slice %36 {offsets = [4, 24], sizes = [1, 24], strides = [1, 1]} : vector<6x48xf32> to vector<1x24xf32>
    %49 = vector.extract_strided_slice %36 {offsets = [5, 24], sizes = [1, 24], strides = [1, 1]} : vector<6x48xf32> to vector<1x24xf32>
    %50 = tpu.concatenate %44, %45, %46, %47, %48, %49 in 1 : vector<1x24xf32>, vector<1x24xf32>, vector<1x24xf32>, vector<1x24xf32>, vector<1x24xf32>, vector<1x24xf32> -> vector<1x144xf32>
    %51 = tpu.concatenate %43, %50 in 0 : vector<1x144xf32>, vector<1x144xf32> -> vector<2x144xf32>
    %c0_18 = arith.constant 0 : index
    %c0_19 = arith.constant 0 : index
    %52 = vector.load %arg8[%c0_18, %c0_19] : memref<144x30xf32, #tpu.memory_space<vmem>>, vector<144x30xf32>
    %cst_20 = arith.constant dense<0.000000e+00> : vector<2x30xf32>
    %53 = tpu.matmul %51, %52, %cst_20 {dimension_numbers = #tpu.dot_dimension_numbers<[1], [0], [0], [1], [0, 0, 1, 1], [], []>} : vector<2x144xf32>, vector<144x30xf32>, vector<2x30xf32> -> vector<2x30xf32>
    %c0_21 = arith.constant 0 : index
    %c0_22 = arith.constant 0 : index
    %54 = vector.load %arg9[%c0_21, %c0_22] : memref<1x30xf32, #tpu.memory_space<vmem>>, vector<1x30xf32>
    %55 = vector.broadcast %54 : vector<1x30xf32> to vector<2x30xf32>
    %56 = arith.addf %53, %55 : vector<2x30xf32>
    %57 = vector.extract_strided_slice %56 {offsets = [0, 0], sizes = [2, 24], strides = [1, 1]} : vector<2x30xf32> to vector<2x24xf32>
    %58 = vector.extract_strided_slice %56 {offsets = [0, 24], sizes = [2, 6], strides = [1, 1]} : vector<2x30xf32> to vector<2x6xf32>
    %59 = vector.extract_strided_slice %57 {offsets = [0, 0], sizes = [1, 24], strides = [1, 1]} : vector<2x24xf32> to vector<1x24xf32>
    %60 = vector.extract_strided_slice %57 {offsets = [1, 0], sizes = [1, 24], strides = [1, 1]} : vector<2x24xf32> to vector<1x24xf32>
    %61 = tpu.concatenate %59, %60 in 1 : vector<1x24xf32>, vector<1x24xf32> -> vector<1x48xf32>
    %62 = vector.extract_strided_slice %2 {offsets = [0, 0], sizes = [1, 48], strides = [1, 1]} : vector<3x48xf32> to vector<1x48xf32>
    %63 = arith.subf %62, %61 : vector<1x48xf32>
    %cst_23 = arith.constant 0.000000e+00 : f32
    %64 = vector.broadcast %cst_23 : f32 to vector<1x1xf32>
    %65 = vector.extract_strided_slice %63 {offsets = [0, 0], sizes = [1, 47], strides = [1, 1]} : vector<1x48xf32> to vector<1x47xf32>
    %66 = tpu.concatenate %64, %65 in 1 : vector<1x1xf32>, vector<1x47xf32> -> vector<1x48xf32>
    %67 = arith.mulf %66, %0 : vector<1x48xf32>
    %68 = vector.extract_strided_slice %63 {offsets = [0, 1], sizes = [1, 47], strides = [1, 1]} : vector<1x48xf32> to vector<1x47xf32>
    %69 = tpu.concatenate %68, %64 in 1 : vector<1x47xf32>, vector<1x1xf32> -> vector<1x48xf32>
    %70 = arith.mulf %69, %1 : vector<1x48xf32>
    %71 = tpu.concatenate %67, %63, %70 in 0 : vector<1x48xf32>, vector<1x48xf32>, vector<1x48xf32> -> vector<3x48xf32>
    %c0_24 = arith.constant 0 : index
    %c0_25 = arith.constant 0 : index
    %72 = vector.load %arg10[%c0_24, %c0_25] : memref<4x3xf32, #tpu.memory_space<vmem>>, vector<4x3xf32>
    %cst_26 = arith.constant dense<0.000000e+00> : vector<4x48xf32>
    %73 = tpu.matmul %72, %71, %cst_26 {dimension_numbers = #tpu.dot_dimension_numbers<[1], [0], [0], [1], [0, 0, 1, 1], [], []>} : vector<4x3xf32>, vector<3x48xf32>, vector<4x48xf32> -> vector<4x48xf32>
    %c0_27 = arith.constant 0 : index
    %c0_28 = arith.constant 0 : index
    %74 = vector.load %arg11[%c0_27, %c0_28] : memref<4x1xf32, #tpu.memory_space<vmem>>, vector<4x1xf32>
    %75 = vector.broadcast %74 : vector<4x1xf32> to vector<4x48xf32>
    %76 = arith.addf %73, %75 : vector<4x48xf32>
    %cst_29 = arith.constant 0.000000e+00 : f32
    %77 = vector.broadcast %cst_29 : f32 to vector<4x48xf32>
    %78 = arith.maximumf %76, %77 : vector<4x48xf32>
    %cst_30 = arith.constant 0.000000e+00 : f32
    %79 = vector.broadcast %cst_30 : f32 to vector<4x1xf32>
    %80 = vector.extract_strided_slice %78 {offsets = [0, 0], sizes = [4, 47], strides = [1, 1]} : vector<4x48xf32> to vector<4x47xf32>
    %81 = tpu.concatenate %79, %80 in 1 : vector<4x1xf32>, vector<4x47xf32> -> vector<4x48xf32>
    %82 = vector.broadcast %0 : vector<1x48xf32> to vector<4x48xf32>
    %83 = arith.mulf %81, %82 : vector<4x48xf32>
    %84 = vector.extract_strided_slice %78 {offsets = [0, 1], sizes = [4, 47], strides = [1, 1]} : vector<4x48xf32> to vector<4x47xf32>
    %85 = tpu.concatenate %84, %79 in 1 : vector<4x47xf32>, vector<4x1xf32> -> vector<4x48xf32>
    %86 = vector.broadcast %1 : vector<1x48xf32> to vector<4x48xf32>
    %87 = arith.mulf %85, %86 : vector<4x48xf32>
    %88 = tpu.concatenate %83, %78, %87 in 0 : vector<4x48xf32>, vector<4x48xf32>, vector<4x48xf32> -> vector<12x48xf32>
    %c0_31 = arith.constant 0 : index
    %c0_32 = arith.constant 0 : index
    %89 = vector.load %arg12[%c0_31, %c0_32] : memref<6x12xf32, #tpu.memory_space<vmem>>, vector<6x12xf32>
    %cst_33 = arith.constant dense<0.000000e+00> : vector<6x48xf32>
    %90 = tpu.matmul %89, %88, %cst_33 {dimension_numbers = #tpu.dot_dimension_numbers<[1], [0], [0], [1], [0, 0, 1, 1], [], []>} : vector<6x12xf32>, vector<12x48xf32>, vector<6x48xf32> -> vector<6x48xf32>
    %c0_34 = arith.constant 0 : index
    %c0_35 = arith.constant 0 : index
    %91 = vector.load %arg13[%c0_34, %c0_35] : memref<6x1xf32, #tpu.memory_space<vmem>>, vector<6x1xf32>
    %92 = vector.broadcast %91 : vector<6x1xf32> to vector<6x48xf32>
    %93 = arith.addf %90, %92 : vector<6x48xf32>
    %cst_36 = arith.constant 0.000000e+00 : f32
    %94 = vector.broadcast %cst_36 : f32 to vector<6x48xf32>
    %95 = arith.maximumf %93, %94 : vector<6x48xf32>
    %96 = vector.extract_strided_slice %95 {offsets = [0, 0], sizes = [1, 24], strides = [1, 1]} : vector<6x48xf32> to vector<1x24xf32>
    %97 = vector.extract_strided_slice %95 {offsets = [1, 0], sizes = [1, 24], strides = [1, 1]} : vector<6x48xf32> to vector<1x24xf32>
    %98 = vector.extract_strided_slice %95 {offsets = [2, 0], sizes = [1, 24], strides = [1, 1]} : vector<6x48xf32> to vector<1x24xf32>
    %99 = vector.extract_strided_slice %95 {offsets = [3, 0], sizes = [1, 24], strides = [1, 1]} : vector<6x48xf32> to vector<1x24xf32>
    %100 = vector.extract_strided_slice %95 {offsets = [4, 0], sizes = [1, 24], strides = [1, 1]} : vector<6x48xf32> to vector<1x24xf32>
    %101 = vector.extract_strided_slice %95 {offsets = [5, 0], sizes = [1, 24], strides = [1, 1]} : vector<6x48xf32> to vector<1x24xf32>
    %102 = tpu.concatenate %96, %97, %98, %99, %100, %101 in 1 : vector<1x24xf32>, vector<1x24xf32>, vector<1x24xf32>, vector<1x24xf32>, vector<1x24xf32>, vector<1x24xf32> -> vector<1x144xf32>
    %103 = vector.extract_strided_slice %95 {offsets = [0, 24], sizes = [1, 24], strides = [1, 1]} : vector<6x48xf32> to vector<1x24xf32>
    %104 = vector.extract_strided_slice %95 {offsets = [1, 24], sizes = [1, 24], strides = [1, 1]} : vector<6x48xf32> to vector<1x24xf32>
    %105 = vector.extract_strided_slice %95 {offsets = [2, 24], sizes = [1, 24], strides = [1, 1]} : vector<6x48xf32> to vector<1x24xf32>
    %106 = vector.extract_strided_slice %95 {offsets = [3, 24], sizes = [1, 24], strides = [1, 1]} : vector<6x48xf32> to vector<1x24xf32>
    %107 = vector.extract_strided_slice %95 {offsets = [4, 24], sizes = [1, 24], strides = [1, 1]} : vector<6x48xf32> to vector<1x24xf32>
    %108 = vector.extract_strided_slice %95 {offsets = [5, 24], sizes = [1, 24], strides = [1, 1]} : vector<6x48xf32> to vector<1x24xf32>
    %109 = tpu.concatenate %103, %104, %105, %106, %107, %108 in 1 : vector<1x24xf32>, vector<1x24xf32>, vector<1x24xf32>, vector<1x24xf32>, vector<1x24xf32>, vector<1x24xf32> -> vector<1x144xf32>
    %110 = tpu.concatenate %102, %109 in 0 : vector<1x144xf32>, vector<1x144xf32> -> vector<2x144xf32>
    %c0_37 = arith.constant 0 : index
    %c0_38 = arith.constant 0 : index
    %111 = vector.load %arg14[%c0_37, %c0_38] : memref<144x30xf32, #tpu.memory_space<vmem>>, vector<144x30xf32>
    %cst_39 = arith.constant dense<0.000000e+00> : vector<2x30xf32>
    %112 = tpu.matmul %110, %111, %cst_39 {dimension_numbers = #tpu.dot_dimension_numbers<[1], [0], [0], [1], [0, 0, 1, 1], [], []>} : vector<2x144xf32>, vector<144x30xf32>, vector<2x30xf32> -> vector<2x30xf32>
    %c0_40 = arith.constant 0 : index
    %c0_41 = arith.constant 0 : index
    %113 = vector.load %arg15[%c0_40, %c0_41] : memref<1x30xf32, #tpu.memory_space<vmem>>, vector<1x30xf32>
    %114 = vector.broadcast %113 : vector<1x30xf32> to vector<2x30xf32>
    %115 = arith.addf %112, %114 : vector<2x30xf32>
    %116 = vector.extract_strided_slice %115 {offsets = [0, 0], sizes = [2, 24], strides = [1, 1]} : vector<2x30xf32> to vector<2x24xf32>
    %117 = vector.extract_strided_slice %115 {offsets = [0, 24], sizes = [2, 6], strides = [1, 1]} : vector<2x30xf32> to vector<2x6xf32>
    %118 = vector.extract_strided_slice %63 {offsets = [0, 0], sizes = [1, 24], strides = [1, 1]} : vector<1x48xf32> to vector<1x24xf32>
    %119 = vector.extract_strided_slice %63 {offsets = [0, 24], sizes = [1, 24], strides = [1, 1]} : vector<1x48xf32> to vector<1x24xf32>
    %120 = tpu.concatenate %118, %119 in 0 : vector<1x24xf32>, vector<1x24xf32> -> vector<2x24xf32>
    %121 = arith.addf %58, %117 : vector<2x6xf32>
    %c0_42 = arith.constant 0 : index
    %c0_43 = arith.constant 0 : index
    %122 = vector.load %arg16[%c0_42, %c0_43] : memref<2x6xf32, #tpu.memory_space<vmem>>, vector<2x6xf32>
    tpu.vector_store %arg16[%c0_42, %c0_43], %121 {strides = array<i32>} : memref<2x6xf32, #tpu.memory_space<vmem>>, vector<2x6xf32>,
    %123 = arith.subf %120, %116 : vector<2x24xf32>
    %c0_44 = arith.constant 0 : index
    %c0_45 = arith.constant 0 : index
    %124 = vector.load %arg17[%c0_44, %c0_45] : memref<2x24xf32, #tpu.memory_space<vmem>>, vector<2x24xf32>
    tpu.vector_store %arg17[%c0_44, %c0_45], %123 {strides = array<i32>} : memref<2x24xf32, #tpu.memory_space<vmem>>, vector<2x24xf32>,
    return
  }
  func.func @transform_0(%arg0: i32) -> (i32, i32) {
    %c0_i32 = arith.constant 0 : i32
    %c0_i32_0 = arith.constant 0 : i32
    %c0_i32_1 = arith.constant 0 : i32
    return %c0_i32, %c0_i32_0 : i32, i32
  }
  func.func @transform_1(%arg0: i32) -> (i32, i32) {
    %c0_i32 = arith.constant 0 : i32
    %c0_i32_0 = arith.constant 0 : i32
    %c0_i32_1 = arith.constant 0 : i32
    return %c0_i32, %c0_i32_0 : i32, i32
  }
  func.func @transform_2(%arg0: i32) -> (i32, i32) {
    %c0_i32 = arith.constant 0 : i32
    %c0_i32_0 = arith.constant 0 : i32
    %c0_i32_1 = arith.constant 0 : i32
    return %c0_i32, %c0_i32_0 : i32, i32
  }
  func.func @transform_3(%arg0: i32) -> (i32, i32) {
    %c0_i32 = arith.constant 0 : i32
    %c0_i32_0 = arith.constant 0 : i32
    %c0_i32_1 = arith.constant 0 : i32
    return %c0_i32, %c0_i32_0 : i32, i32
  }
  func.func @transform_4(%arg0: i32) -> (i32, i32) {
    %c0_i32 = arith.constant 0 : i32
    %c0_i32_0 = arith.constant 0 : i32
    %c0_i32_1 = arith.constant 0 : i32
    return %c0_i32, %c0_i32_0 : i32, i32
  }
  func.func @transform_5(%arg0: i32) -> (i32, i32) {
    %c0_i32 = arith.constant 0 : i32
    %c0_i32_0 = arith.constant 0 : i32
    %c0_i32_1 = arith.constant 0 : i32
    return %c0_i32, %c0_i32_0 : i32, i32
  }
  func.func @transform_6(%arg0: i32) -> (i32, i32) {
    %c0_i32 = arith.constant 0 : i32
    %c0_i32_0 = arith.constant 0 : i32
    %c0_i32_1 = arith.constant 0 : i32
    return %c0_i32, %c0_i32_0 : i32, i32
  }
  func.func @transform_7(%arg0: i32) -> (i32, i32) {
    %c0_i32 = arith.constant 0 : i32
    %c0_i32_0 = arith.constant 0 : i32
    %c0_i32_1 = arith.constant 0 : i32
    return %c0_i32, %c0_i32_0 : i32, i32
  }
  func.func @transform_8(%arg0: i32) -> (i32, i32) {
    %c0_i32 = arith.constant 0 : i32
    %c0_i32_0 = arith.constant 0 : i32
    %c0_i32_1 = arith.constant 0 : i32
    return %c0_i32, %c0_i32_0 : i32, i32
  }
  func.func @transform_9(%arg0: i32) -> (i32, i32) {
    %c0_i32 = arith.constant 0 : i32
    %c0_i32_0 = arith.constant 0 : i32
    %c0_i32_1 = arith.constant 0 : i32
    return %c0_i32, %c0_i32_0 : i32, i32
  }
  func.func @transform_10(%arg0: i32) -> (i32, i32) {
    %c0_i32 = arith.constant 0 : i32
    %c0_i32_0 = arith.constant 0 : i32
    %c0_i32_1 = arith.constant 0 : i32
    return %c0_i32, %c0_i32_0 : i32, i32
  }
  func.func @transform_11(%arg0: i32) -> (i32, i32) {
    %c0_i32 = arith.constant 0 : i32
    %c0_i32_0 = arith.constant 0 : i32
    %c0_i32_1 = arith.constant 0 : i32
    return %c0_i32, %c0_i32_0 : i32, i32
  }
  func.func @transform_12(%arg0: i32) -> (i32, i32) {
    %c0_i32 = arith.constant 0 : i32
    %c0_i32_0 = arith.constant 0 : i32
    %c0_i32_1 = arith.constant 0 : i32
    return %c0_i32, %c0_i32_0 : i32, i32
  }
  func.func @transform_13(%arg0: i32) -> (i32, i32) {
    %c0_i32 = arith.constant 0 : i32
    %c0_i32_0 = arith.constant 0 : i32
    %c0_i32_1 = arith.constant 0 : i32
    return %c0_i32, %c0_i32_0 : i32, i32
  }
  func.func @transform_14(%arg0: i32) -> (i32, i32) {
    %c0_i32 = arith.constant 0 : i32
    %c0_i32_0 = arith.constant 0 : i32
    %c0_i32_1 = arith.constant 0 : i32
    return %c0_i32, %c0_i32_0 : i32, i32
  }
  func.func @transform_15(%arg0: i32) -> (i32, i32) {
    %c0_i32 = arith.constant 0 : i32
    %c0_i32_0 = arith.constant 0 : i32
    %c0_i32_1 = arith.constant 0 : i32
    return %c0_i32, %c0_i32_0 : i32, i32
  }
  func.func @transform_16(%arg0: i32) -> (i32, i32) {
    %c0_i32 = arith.constant 0 : i32
    %c0_i32_0 = arith.constant 0 : i32
    %c0_i32_1 = arith.constant 0 : i32
    return %c0_i32, %c0_i32_0 : i32, i32
  }
}

</mosaic_0001>

<llo_original>
// kernel: tpu_custom_call.1
$region0: #{tpu_custom_call.1}
  #allocation0 [shape = 'u32[]', space=smem, size = 0x4, offset = 0x4, fixed_abs, tag = 'smem constant byte address 0x4 - core index']
  #allocation1 [shape = 'u32[144,128]{1,0:T(1,128)}', space=vmem, size = 0x12000, scoped, tag = 'internal scratch']
  %s0 = inlined_call_operand.vmem [shape: f32[3,48], index: 0, kind: input, shape index: {}]
  %s1 = inlined_call_operand.vmem [shape: f32[1,48], index: 1, kind: input, shape index: {}]
  %s2 = inlined_call_operand.vmem [shape: f32[1,48], index: 2, kind: input, shape index: {}]
  %s3 = inlined_call_operand.vmem [shape: f32[4,9], index: 3, kind: input, shape index: {}]
  %s4 = inlined_call_operand.vmem [shape: f32[4,1], index: 4, kind: input, shape index: {}]
  %s5 = inlined_call_operand.vmem [shape: f32[6,12], index: 5, kind: input, shape index: {}]
  %s6 = inlined_call_operand.vmem [shape: f32[6,1], index: 6, kind: input, shape index: {}]
  %s7 = inlined_call_operand.vmem [shape: f32[144,30], index: 7, kind: input, shape index: {}]
  %s8 = inlined_call_operand.vmem [shape: f32[1,30], index: 8, kind: input, shape index: {}]
  %s9 = inlined_call_operand.vmem [shape: f32[4,3], index: 9, kind: input, shape index: {}]
  %s10 = inlined_call_operand.vmem [shape: f32[4,1], index: 10, kind: input, shape index: {}]
  %s11 = inlined_call_operand.vmem [shape: f32[6,12], index: 11, kind: input, shape index: {}]
  %s12 = inlined_call_operand.vmem [shape: f32[6,1], index: 12, kind: input, shape index: {}]
  %s13 = inlined_call_operand.vmem [shape: f32[144,30], index: 13, kind: input, shape index: {}]
  %s14 = inlined_call_operand.vmem [shape: f32[1,30], index: 14, kind: input, shape index: {}]
  %s15 = inlined_call_operand.hbm [shape: f32[2,6], index: 15, kind: output, shape index: {0}]
  %s16 = inlined_call_operand.hbm [shape: f32[2,24], index: 16, kind: output, shape index: {1}]
  %17 = xla_tuple %s15, %s16
  %s18 = sld [smem:[#allocation0]]
  $region78: #{tpu_custom_call.1} parent=0
    _
  %s20 = ssub.s32 1, %s18
  %s21 = scalar_select 0, %s20, %s18
  $region1: #{tpu_custom_call.1} parent=0
    #allocation2 [shape = 'u8[1024]{0}', space=vmem, size = 0x400, scoped, tag = 'output window, operand 0, single buffered']
    #allocation3 [shape = 's32[1]{0}', space=sflag, size = 0x4, scoped, tag = 'scoped memory for tpu_custom_call.1']
    #allocation4 [shape = 'u8[1024]{0}', space=vmem, size = 0x400, scoped, tag = 'output window, operand 1, single buffered']
    #allocation5 [shape = 's32[1]{0}', space=sflag, size = 0x4, scoped, tag = 'scoped memory for tpu_custom_call.1']
    %22 = vsyncpa [#allocation3], 0
    %23 = vsyncpa [#allocation5], 0
    // Predicated region
    $region2: #{tpu_custom_call.1} parent=1 // pred_check
      _
    $region3: #{tpu_custom_call.1} parent=1 // pred_check_branch
      %25 = sbr.rel (0) target = $region5
    $region4: #{tpu_custom_call.1} parent=1 // pred_region
      _
    $region5: #{tpu_custom_call.1} parent=1 // pred_fallthru
      _
    // Predicated region
    $region6: #{tpu_custom_call.1} parent=1 // pred_check
      _
    $region7: #{tpu_custom_call.1} parent=1 // pred_check_branch
      %27 = sbr.rel (0) target = $region9
    $region8: #{tpu_custom_call.1} parent=1 // pred_region
      _
    $region9: #{tpu_custom_call.1} parent=1 // pred_fallthru
      _
    // Predicated region
    $region10: #{tpu_custom_call.1} parent=1 // pred_check
      _
    $region11: #{tpu_custom_call.1} parent=1 // pred_check_branch
      %29 = sbr.rel (0) target = $region13
    $region12: #{tpu_custom_call.1} parent=1 // pred_region
      _
    $region13: #{tpu_custom_call.1} parent=1 // pred_fallthru
      _
    // Predicated region
    $region14: #{tpu_custom_call.1} parent=1 // pred_check
      _
    $region15: #{tpu_custom_call.1} parent=1 // pred_check_branch
      %31 = sbr.rel (0) target = $region17
    $region16: #{tpu_custom_call.1} parent=1 // pred_region
      _
    $region17: #{tpu_custom_call.1} parent=1 // pred_fallthru
      _
    // Predicated region
    $region18: #{tpu_custom_call.1} parent=1 // pred_check
      _
    $region19: #{tpu_custom_call.1} parent=1 // pred_check_branch
      %33 = sbr.rel (0) target = $region21
    $region20: #{tpu_custom_call.1} parent=1 // pred_region
      _
    $region21: #{tpu_custom_call.1} parent=1 // pred_fallthru
      _
    // Predicated region
    $region22: #{tpu_custom_call.1} parent=1 // pred_check
      _
    $region23: #{tpu_custom_call.1} parent=1 // pred_check_branch
      %35 = sbr.rel (0) target = $region25
    $region24: #{tpu_custom_call.1} parent=1 // pred_region
      _
    $region25: #{tpu_custom_call.1} parent=1 // pred_fallthru
      _
    // Predicated region
    $region26: #{tpu_custom_call.1} parent=1 // pred_check
      _
    $region27: #{tpu_custom_call.1} parent=1 // pred_check_branch
      %37 = sbr.rel (0) target = $region29
    $region28: #{tpu_custom_call.1} parent=1 // pred_region
      _
    $region29: #{tpu_custom_call.1} parent=1 // pred_fallthru
      _
    // Predicated region
    $region30: #{tpu_custom_call.1} parent=1 // pred_check
      _
    $region31: #{tpu_custom_call.1} parent=1 // pred_check_branch
      %39 = sbr.rel (0) target = $region33
    $region32: #{tpu_custom_call.1} parent=1 // pred_region
      _
    $region33: #{tpu_custom_call.1} parent=1 // pred_fallthru
      _
    // Predicated region
    $region34: #{tpu_custom_call.1} parent=1 // pred_check
      _
    $region35: #{tpu_custom_call.1} parent=1 // pred_check_branch
      %41 = sbr.rel (0) target = $region37
    $region36: #{tpu_custom_call.1} parent=1 // pred_region
      _
    $region37: #{tpu_custom_call.1} parent=1 // pred_fallthru
      _
    // Predicated region
    $region38: #{tpu_custom_call.1} parent=1 // pred_check
      _
    $region39: #{tpu_custom_call.1} parent=1 // pred_check_branch
      %43 = sbr.rel (0) target = $region41
    $region40: #{tpu_custom_call.1} parent=1 // pred_region
      _
    $region41: #{tpu_custom_call.1} parent=1 // pred_fallthru
      _
    // Predicated region
    $region42: #{tpu_custom_call.1} parent=1 // pred_check
      _
    $region43: #{tpu_custom_call.1} parent=1 // pred_check_branch
      %45 = sbr.rel (0) target = $region45
    $region44: #{tpu_custom_call.1} parent=1 // pred_region
      _
    $region45: #{tpu_custom_call.1} parent=1 // pred_fallthru
      _
    // Predicated region
    $region46: #{tpu_custom_call.1} parent=1 // pred_check
      _
    $region47: #{tpu_custom_call.1} parent=1 // pred_check_branch
      %47 = sbr.rel (0) target = $region49
    $region48: #{tpu_custom_call.1} parent=1 // pred_region
      _
    $region49: #{tpu_custom_call.1} parent=1 // pred_fallthru
      _
    // Predicated region
    $region50: #{tpu_custom_call.1} parent=1 // pred_check
      _
    $region51: #{tpu_custom_call.1} parent=1 // pred_check_branch
      %49 = sbr.rel (0) target = $region53
    $region52: #{tpu_custom_call.1} parent=1 // pred_region
      _
    $region53: #{tpu_custom_call.1} parent=1 // pred_fallthru
      _
    // Predicated region
    $region54: #{tpu_custom_call.1} parent=1 // pred_check
      _
    $region55: #{tpu_custom_call.1} parent=1 // pred_check_branch
      %51 = sbr.rel (0) target = $region57
    $region56: #{tpu_custom_call.1} parent=1 // pred_region
      _
    $region57: #{tpu_custom_call.1} parent=1 // pred_fallthru
      _
    // Predicated region
    $region58: #{tpu_custom_call.1} parent=1 // pred_check
      _
    $region59: #{tpu_custom_call.1} parent=1 // pred_check_branch
      %53 = sbr.rel (0) target = $region61
    $region60: #{tpu_custom_call.1} parent=1 // pred_region
      _
    $region61: #{tpu_custom_call.1} parent=1 // pred_fallthru
      _
    %v54 = vld [vmem:[%s1] sm:$0x1]
    %v55 = vld [vmem:[%s2] sm:$0x1]
    %v56 = vld [vmem:[%s0] sm:$0x7]
    %58 = vrot.lane.b32.xlu0 %v56, 1
    %v59 = vpop.permute.xlu0 %58
    %vm61 = vcmask 7168
    %v62 = vsel %vm61, 0.0, %v59
    %v64 = vlaneseq
    %v65 = vshrl.u32 %v64, 7
    %v66 = vsub.s32 0, %v65
    %v67 = vrot.slane %v54, %v66
    %v69 = vmul.f32 %v62, %v67
    %70 = vrot.lane.b32.xlu0 %v56, 127
    %v71 = vpop.permute.xlu0 %70
    %vm73 = vcmask 384000
    %v74 = vsel %vm73, %v71, 0.0
    %v76 = vlaneseq
    %v77 = vshrl.u32 %v76, 7
    %v78 = vsub.s32 0, %v77
    %v79 = vrot.slane %v55, %v78
    %v81 = vmul.f32 %v74, %v79
    %v82 = vrot.slane %v56, 5
    %v85 = vrot.slane %v81, 2
    %vm87 = vcmask 1042432
    %v88 = vsel %vm87, %v69, %v82
    %vm89 = vcmask 1045504
    %v90 = vsel %vm89, %v88, %v85
    %v91 = vld [vmem:[%s3] sm:$0xf]
    %v92 = vld [vmem:[%s4] sm:$0xf]
    %94 = vset.pattern.permute.xlu0 0
    %95 = vperm.xlu0 %94, %v92
    %v96 = vpop.permute.xlu0 %95
    %vm98 = vcmask 72704
    %v100 = vsel %vm98, %v91, 0
    %vm102 = vcmask 1040384
    %v103 = vsel %vm102, %v85, 0
    %105 = vmatprep.subr.mxu0 0.0
    %106 = vmatpush1.msra.mxu0 %v90
    %107 = vmatprep.subr.mxu0 0.0
    %108 = vmatpush1.msra.mxu0 %v103
    %109 = vmatprep.subr.mxu0 0.0
    %110 = vmatpush1.msra.mxu0 0.0
    %111 = vmatprep.subr.mxu0 0.0
    %112 = vmatpush1.msra.mxu0 0.0
    %113 = vmatprep.subr.mxu0 0.0
    %114 = vmatpush1.msra.mxu0 0.0
    %115 = vmatprep.subr.mxu0 0.0
    %116 = vmatpush1.msra.mxu0 0.0
    %117 = vmatprep.subr.mxu0 0.0
    %118 = vmatpush1.msra.mxu0 0.0
    %119 = vmatprep.subr.mxu0 0.0
    %120 = vmatpush1.msra.mxu0 0.0
    %121 = vmatprep.subr.mxu0 0.0
    %122 = vmatpush1.msra.mxu0 0.0
    %123 = vmatprep.subr.mxu0 0.0
    %124 = vmatpush1.msra.mxu0 0.0
    %125 = vmatprep.subr.mxu0 0.0
    %126 = vmatpush1.msra.mxu0 0.0
    %127 = vmatprep.subr.mxu0 0.0
    %128 = vmatpush1.msra.mxu0 0.0
    %129 = vmatprep.subr.mxu0 0.0
    %130 = vmatpush1.msra.mxu0 0.0
    %131 = vmatprep.subr.mxu0 0.0
    %132 = vmatpush1.msra.mxu0 0.0
    %133 = vmatprep.subr.mxu0 0.0
    %134 = vmatpush1.msra.mxu0 0.0
    %135 = vmatprep.subr.mxu0 0.0
    %136 = vmatpush1.msra.mxu0 0.0
    %137 = vmatprep.subr.mxu0 0.0
    %138 = vmatpush1.msra.mxu0 0.0
    %139 = vmatprep.subr.mxu0 0.0
    %140 = vmatpush1.msra.mxu0 0.0
    %141 = vmatprep.subr.mxu0 0.0
    %142 = vmatpush1.msra.mxu0 0.0
    %143 = vmatprep.subr.mxu0 0.0
    %144 = vmatpush1.msra.mxu0 0.0
    %145 = vmatprep.subr.mxu0 0.0
    %146 = vmatpush1.msra.mxu0 0.0
    %147 = vmatprep.subr.mxu0 0.0
    %148 = vmatpush1.msra.mxu0 0.0
    %149 = vmatprep.subr.mxu0 0.0
    %150 = vmatpush1.msra.mxu0 0.0
    %151 = vmatprep.subr.mxu0 0.0
    %152 = vmatpush1.msra.mxu0 0.0
    %153 = vmatprep.subr.mxu0 0.0
    %154 = vmatpush1.msra.mxu0 0.0
    %155 = vmatprep.subr.mxu0 0.0
    %156 = vmatpush1.msra.mxu0 0.0
    %157 = vmatprep.subr.mxu0 0.0
    %158 = vmatpush1.msra.mxu0 0.0
    %159 = vmatprep.subr.mxu0 0.0
    %160 = vmatpush1.msra.mxu0 0.0
    %161 = vmatprep.subr.mxu0 0.0
    %162 = vmatpush1.msra.mxu0 0.0
    %163 = vmatprep.subr.mxu0 0.0
    %164 = vmatpush1.msra.mxu0 0.0
    %165 = vmatprep.subr.mxu0 0.0
    %166 = vmatpush1.msra.mxu0 0.0
    %167 = vmatprep.subr.mxu0 0.0
    %168 = vmatpush1.msra.mxu0 0.0
    %169 = vmatprep.mubr.f32.mxu0 0.0
    %170 = vmatmul.mubr.f32.gmra.mrb[0].mxu0 %v100
    %v171 = vpop.f32.mrb[0].mxu0
    %v172 = vadd.f32 %v96, %v171
    %v173 = vpop.f32.mrb[0].mxu0
    %174 = vdwg.mxu0
    %v175 = vmax.f32 %v172, 0.0
    %177 = vrot.lane.b32.xlu0 %v175, 1
    %v178 = vpop.permute.xlu0 %177
    %v180 = vsel %vm61, 0.0, %v178
    %v181 = vmul.f32 %v180, %v67
    %182 = vrot.lane.b32.xlu0 %v175, 127
    %v183 = vpop.permute.xlu0 %182
    %v185 = vsel %vm73, %v183, 0.0
    %v186 = vmul.f32 %v185, %v79
    %v187 = vrot.slane %v175, 4
    %vm189 = vcmask 1043456
    %v190 = vsel %vm189, %v181, %v187
    %v191 = vld [vmem:[%s5] sm:$0x3f]
    %v192 = vld [vmem:[%s6] sm:$0x3f]
    %194 = vset.pattern.permute.xlu0 0
    %195 = vperm.xlu0 %194, %v192
    %v196 = vpop.permute.xlu0 %195
    %vm198 = vcmask 97280
    %v200 = vsel %vm198, %v191, 0
    %v203 = vsel %vm189, %v186, 0
    %205 = vmatprep.subr.mxu0 0.0
    %206 = vmatpush1.msra.mxu0 %v190
    %207 = vmatprep.subr.mxu0 0.0
    %208 = vmatpush1.msra.mxu0 %v203
    %209 = vmatprep.subr.mxu0 0.0
    %210 = vmatpush1.msra.mxu0 0.0
    %211 = vmatprep.subr.mxu0 0.0
    %212 = vmatpush1.msra.mxu0 0.0
    %213 = vmatprep.subr.mxu0 0.0
    %214 = vmatpush1.msra.mxu0 0.0
    %215 = vmatprep.subr.mxu0 0.0
    %216 = vmatpush1.msra.mxu0 0.0
    %217 = vmatprep.subr.mxu0 0.0
    %218 = vmatpush1.msra.mxu0 0.0
    %219 = vmatprep.subr.mxu0 0.0
    %220 = vmatpush1.msra.mxu0 0.0
    %221 = vmatprep.subr.mxu0 0.0
    %222 = vmatpush1.msra.mxu0 0.0
    %223 = vmatprep.subr.mxu0 0.0
    %224 = vmatpush1.msra.mxu0 0.0
    %225 = vmatprep.subr.mxu0 0.0
    %226 = vmatpush1.msra.mxu0 0.0
    %227 = vmatprep.subr.mxu0 0.0
    %228 = vmatpush1.msra.mxu0 0.0
    %229 = vmatprep.subr.mxu0 0.0
    %230 = vmatpush1.msra.mxu0 0.0
    %231 = vmatprep.subr.mxu0 0.0
    %232 = vmatpush1.msra.mxu0 0.0
    %233 = vmatprep.subr.mxu0 0.0
    %234 = vmatpush1.msra.mxu0 0.0
    %235 = vmatprep.subr.mxu0 0.0
    %236 = vmatpush1.msra.mxu0 0.0
    %237 = vmatprep.subr.mxu0 0.0
    %238 = vmatpush1.msra.mxu0 0.0
    %239 = vmatprep.subr.mxu0 0.0
    %240 = vmatpush1.msra.mxu0 0.0
    %241 = vmatprep.subr.mxu0 0.0
    %242 = vmatpush1.msra.mxu0 0.0
    %243 = vmatprep.subr.mxu0 0.0
    %244 = vmatpush1.msra.mxu0 0.0
    %245 = vmatprep.subr.mxu0 0.0
    %246 = vmatpush1.msra.mxu0 0.0
    %247 = vmatprep.subr.mxu0 0.0
    %248 = vmatpush1.msra.mxu0 0.0
    %249 = vmatprep.subr.mxu0 0.0
    %250 = vmatpush1.msra.mxu0 0.0
    %251 = vmatprep.subr.mxu0 0.0
    %252 = vmatpush1.msra.mxu0 0.0
    %253 = vmatprep.subr.mxu0 0.0
    %254 = vmatpush1.msra.mxu0 0.0
    %255 = vmatprep.subr.mxu0 0.0
    %256 = vmatpush1.msra.mxu0 0.0
    %257 = vmatprep.subr.mxu0 0.0
    %258 = vmatpush1.msra.mxu0 0.0
    %259 = vmatprep.subr.mxu0 0.0
    %260 = vmatpush1.msra.mxu0 0.0
    %261 = vmatprep.subr.mxu0 0.0
    %262 = vmatpush1.msra.mxu0 0.0
    %263 = vmatprep.subr.mxu0 0.0
    %264 = vmatpush1.msra.mxu0 0.0
    %265 = vmatprep.subr.mxu0 0.0
    %266 = vmatpush1.msra.mxu0 0.0
    %267 = vmatprep.subr.mxu0 0.0
    %268 = vmatpush1.msra.mxu0 0.0
    %269 = vmatprep.mubr.f32.mxu0 0.0
    %270 = vmatmul.mubr.f32.gmra.mrb[0].mxu0 %v200
    %v271 = vpop.f32.mrb[0].mxu0
    %v272 = vadd.f32 %v196, %v271
    %v273 = vpop.f32.mrb[0].mxu0
    %274 = vdwg.mxu0
    %v275 = vmax.f32 %v272, 0.0
    %v277 = vrot.slane %v275, 1
    %278 = vrot.lane.b32.xlu0 %v277, 24
    %v279 = vpop.permute.xlu0 %278
    %v281 = vrot.slane %v275, 2
    %282 = vrot.lane.b32.xlu0 %v281, 48
    %v283 = vpop.permute.xlu0 %282
    %v285 = vrot.slane %v275, 3
    %286 = vrot.lane.b32.xlu0 %v285, 72
    %v287 = vpop.permute.xlu0 %286
    %v289 = vrot.slane %v275, 4
    %290 = vrot.lane.b32.xlu0 %v289, 96
    %v291 = vpop.permute.xlu0 %290
    %v293 = vrot.slane %v275, 5
    %294 = vrot.lane.b32.xlu0 %v293, 120
    %v295 = vpop.permute.xlu0 %294
    %vm297 = vcmask 195584
    %v298 = vsel %vm297, %v275, %v279
    %vm299 = vcmask 392192
    %v300 = vsel %vm299, %v298, %v283
    %vm301 = vcmask 588800
    %v302 = vsel %vm301, %v300, %v287
    %vm303 = vcmask 785408
    %v304 = vsel %vm303, %v302, %v291
    %vm305 = vcmask 982016
    %v306 = vsel %vm305, %v304, %v295
    %307 = vrot.lane.b32.xlu0 %v275, 104
    %v308 = vpop.permute.xlu0 %307
    %311 = vrot.lane.b32.xlu0 %v281, 24
    %v312 = vpop.permute.xlu0 %311
    %314 = vrot.lane.b32.xlu0 %v285, 48
    %v315 = vpop.permute.xlu0 %314
    %317 = vrot.lane.b32.xlu0 %v289, 72
    %v318 = vpop.permute.xlu0 %317
    %320 = vrot.lane.b32.xlu0 %v293, 96
    %v321 = vpop.permute.xlu0 %320
    %v323 = vsel %vm297, %v308, %v277
    %v324 = vsel %vm299, %v323, %v312
    %v325 = vsel %vm301, %v324, %v315
    %v326 = vsel %vm303, %v325, %v318
    %v327 = vsel %vm305, %v326, %v321
    %v329 = vrot.slane %v327, 7
    %v330 = vrot.slane %v321, 7
    %v333 = vsel %vm102, %v306, %v329
    %v334 = vsel %vm102, %v295, %v330
    %v335 = vld [vmem:[%s7] sm:$0xff]
    %v336 = vld [vmem:[%s7 + $0x8] sm:$0xff]
    %v337 = vld [vmem:[%s7 + $0x10] sm:$0xff]
    %v338 = vld [vmem:[%s7 + $0x18] sm:$0xff]
    %v339 = vld [vmem:[%s7 + $0x20] sm:$0xff]
    %v340 = vld [vmem:[%s7 + $0x28] sm:$0xff]
    %v341 = vld [vmem:[%s7 + $0x30] sm:$0xff]
    %v342 = vld [vmem:[%s7 + $0x38] sm:$0xff]
    %v343 = vld [vmem:[%s7 + $0x40] sm:$0xff]
    %v344 = vld [vmem:[%s7 + $0x48] sm:$0xff]
    %v345 = vld [vmem:[%s7 + $0x50] sm:$0xff]
    %v346 = vld [vmem:[%s7 + $0x58] sm:$0xff]
    %v347 = vld [vmem:[%s7 + $0x60] sm:$0xff]
    %v348 = vld [vmem:[%s7 + $0x68] sm:$0xff]
    %v349 = vld [vmem:[%s7 + $0x70] sm:$0xff]
    %v350 = vld [vmem:[%s7 + $0x78] sm:$0xff]
    %v351 = vld [vmem:[%s7 + $0x80] sm:$0xff]
    %v352 = vld [vmem:[%s7 + $0x88] sm:$0xff]
    %v353 = vld [vmem:[%s8] sm:$0x1]
    %v355 = vlaneseq
    %v356 = vshrl.u32 %v355, 7
    %v357 = vsub.s32 0, %v356
    %v358 = vrot.slane %v353, %v357
    %vm360 = vcmask 130048
    %v362 = vsel %vm360, %v334, 0
    %364 = vmatprep.subr.mxu0 0.0
    %365 = vmatpush1.msra.mxu0 %v335
    %366 = vmatprep.subr.mxu0 0.0
    %367 = vmatpush1.msra.mxu0 %v336
    %368 = vmatprep.subr.mxu0 0.0
    %369 = vmatpush1.msra.mxu0 %v337
    %370 = vmatprep.subr.mxu0 0.0
    %371 = vmatpush1.msra.mxu0 %v338
    %372 = vmatprep.subr.mxu0 0.0
    %373 = vmatpush1.msra.mxu0 %v339
    %374 = vmatprep.subr.mxu0 0.0
    %375 = vmatpush1.msra.mxu0 %v340
    %376 = vmatprep.subr.mxu0 0.0
    %377 = vmatpush1.msra.mxu0 %v341
    %378 = vmatprep.subr.mxu0 0.0
    %379 = vmatpush1.msra.mxu0 %v342
    %380 = vmatprep.subr.mxu0 0.0
    %381 = vmatpush1.msra.mxu0 %v343
    %382 = vmatprep.subr.mxu0 0.0
    %383 = vmatpush1.msra.mxu0 %v344
    %384 = vmatprep.subr.mxu0 0.0
    %385 = vmatpush1.msra.mxu0 %v345
    %386 = vmatprep.subr.mxu0 0.0
    %387 = vmatpush1.msra.mxu0 %v346
    %388 = vmatprep.subr.mxu0 0.0
    %389 = vmatpush1.msra.mxu0 %v347
    %390 = vmatprep.subr.mxu0 0.0
    %391 = vmatpush1.msra.mxu0 %v348
    %392 = vmatprep.subr.mxu0 0.0
    %393 = vmatpush1.msra.mxu0 %v349
    %394 = vmatprep.subr.mxu0 0.0
    %395 = vmatpush1.msra.mxu0 %v350
    %396 = vmatprep.subr.mxu0 0.0
    %397 = vmatpush1.msra.mxu0 %v351
    %398 = vmatprep.subr.mxu0 0.0
    %399 = vmatpush1.msra.mxu0 %v352
    %400 = vmatprep.subr.mxu0 0.0
    %401 = vmatpush1.msra.mxu0 0.0
    %402 = vmatprep.subr.mxu0 0.0
    %403 = vmatpush1.msra.mxu0 0.0
    %404 = vmatprep.subr.mxu0 0.0
    %405 = vmatpush1.msra.mxu0 0.0
    %406 = vmatprep.subr.mxu0 0.0
    %407 = vmatpush1.msra.mxu0 0.0
    %408 = vmatprep.subr.mxu0 0.0
    %409 = vmatpush1.msra.mxu0 0.0
    %410 = vmatprep.subr.mxu0 0.0
    %411 = vmatpush1.msra.mxu0 0.0
    %412 = vmatprep.subr.mxu0 0.0
    %413 = vmatpush1.msra.mxu0 0.0
    %414 = vmatprep.subr.mxu0 0.0
    %415 = vmatpush1.msra.mxu0 0.0
    %416 = vmatprep.subr.mxu0 0.0
    %417 = vmatpush1.msra.mxu0 0.0
    %418 = vmatprep.subr.mxu0 0.0
    %419 = vmatpush1.msra.mxu0 0.0
    %420 = vmatprep.subr.mxu0 0.0
    %421 = vmatpush1.msra.mxu0 0.0
    %422 = vmatprep.subr.mxu0 0.0
    %423 = vmatpush1.msra.mxu0 0.0
    %424 = vmatprep.subr.mxu0 0.0
    %425 = vmatpush1.msra.mxu0 0.0
    %426 = vmatprep.subr.mxu0 0.0
    %427 = vmatpush1.msra.mxu0 0.0
    %428 = vmatprep.mubr.f32.mxu0 %v362
    %429 = vmatmul.mubr.f32.gmra.mrb[0].mxu0 %v333
    %v430 = vpop.f32.mrb[0].mxu0
    %v431 = vadd.f32 %v358, %v430
    %v432 = vpop.f32.mrb[0].mxu0
    %433 = vdwg.mxu0
    %v435 = vrot.slane %v431, 1
    %436 = vrot.lane.b32.xlu0 %v435, 24
    %v437 = vpop.permute.xlu0 %436
    %v439 = vsel %vm297, %v431, %v437
    %v440 = vsub.f32 %v56, %v439
    %442 = vrot.lane.b32.xlu0 %v440, 1
    %v443 = vpop.permute.xlu0 %442
    %v445 = vsel %vm61, 0.0, %v443
    %v446 = vmul.f32 %v445, %v54
    %447 = vrot.lane.b32.xlu0 %v440, 127
    %v448 = vpop.permute.xlu0 %447
    %v450 = vsel %vm73, %v448, 0.0
    %v451 = vmul.f32 %v450, %v55
    %v452 = vrot.slane %v440, 7
    %v455 = vrot.slane %v451, 6
    %v457 = vsel %vm102, %v446, %v452
    %vm458 = vcmask 1041408
    %v459 = vsel %vm458, %v457, %v455
    %v460 = vld [vmem:[%s9] sm:$0xf]
    %v461 = vld [vmem:[%s10] sm:$0xf]
    %463 = vset.pattern.permute.xlu0 0
    %464 = vperm.xlu0 %463, %v461
    %v465 = vpop.permute.xlu0 %464
    %vm467 = vcmask 23552
    %v469 = vsel %vm467, %v460, 0
    %v472 = vsel %vm87, %v459, 0
    %474 = vmatprep.subr.mxu0 0.0
    %475 = vmatpush1.msra.mxu0 %v472
    %476 = vmatprep.subr.mxu0 0.0
    %477 = vmatpush1.msra.mxu0 0.0
    %478 = vmatprep.subr.mxu0 0.0
    %479 = vmatpush1.msra.mxu0 0.0
    %480 = vmatprep.subr.mxu0 0.0
    %481 = vmatpush1.msra.mxu0 0.0
    %482 = vmatprep.subr.mxu0 0.0
    %483 = vmatpush1.msra.mxu0 0.0
    %484 = vmatprep.subr.mxu0 0.0
    %485 = vmatpush1.msra.mxu0 0.0
    %486 = vmatprep.subr.mxu0 0.0
    %487 = vmatpush1.msra.mxu0 0.0
    %488 = vmatprep.subr.mxu0 0.0
    %489 = vmatpush1.msra.mxu0 0.0
    %490 = vmatprep.subr.mxu0 0.0
    %491 = vmatpush1.msra.mxu0 0.0
    %492 = vmatprep.subr.mxu0 0.0
    %493 = vmatpush1.msra.mxu0 0.0
    %494 = vmatprep.subr.mxu0 0.0
    %495 = vmatpush1.msra.mxu0 0.0
    %496 = vmatprep.subr.mxu0 0.0
    %497 = vmatpush1.msra.mxu0 0.0
    %498 = vmatprep.subr.mxu0 0.0
    %499 = vmatpush1.msra.mxu0 0.0
    %500 = vmatprep.subr.mxu0 0.0
    %501 = vmatpush1.msra.mxu0 0.0
    %502 = vmatprep.subr.mxu0 0.0
    %503 = vmatpush1.msra.mxu0 0.0
    %504 = vmatprep.subr.mxu0 0.0
    %505 = vmatpush1.msra.mxu0 0.0
    %506 = vmatprep.subr.mxu0 0.0
    %507 = vmatpush1.msra.mxu0 0.0
    %508 = vmatprep.subr.mxu0 0.0
    %509 = vmatpush1.msra.mxu0 0.0
    %510 = vmatprep.subr.mxu0 0.0
    %511 = vmatpush1.msra.mxu0 0.0
    %512 = vmatprep.subr.mxu0 0.0
    %513 = vmatpush1.msra.mxu0 0.0
    %514 = vmatprep.subr.mxu0 0.0
    %515 = vmatpush1.msra.mxu0 0.0
    %516 = vmatprep.subr.mxu0 0.0
    %517 = vmatpush1.msra.mxu0 0.0
    %518 = vmatprep.subr.mxu0 0.0
    %519 = vmatpush1.msra.mxu0 0.0
    %520 = vmatprep.subr.mxu0 0.0
    %521 = vmatpush1.msra.mxu0 0.0
    %522 = vmatprep.subr.mxu0 0.0
    %523 = vmatpush1.msra.mxu0 0.0
    %524 = vmatprep.subr.mxu0 0.0
    %525 = vmatpush1.msra.mxu0 0.0
    %526 = vmatprep.subr.mxu0 0.0
    %527 = vmatpush1.msra.mxu0 0.0
    %528 = vmatprep.subr.mxu0 0.0
    %529 = vmatpush1.msra.mxu0 0.0
    %530 = vmatprep.subr.mxu0 0.0
    %531 = vmatpush1.msra.mxu0 0.0
    %532 = vmatprep.subr.mxu0 0.0
    %533 = vmatpush1.msra.mxu0 0.0
    %534 = vmatprep.subr.mxu0 0.0
    %535 = vmatpush1.msra.mxu0 0.0
    %536 = vmatprep.subr.mxu0 0.0
    %537 = vmatpush1.msra.mxu0 0.0
    %538 = vmatprep.mubr.f32.mxu0 0.0
    %539 = vmatmul.mubr.f32.gmra.mrb[0].mxu0 %v469
    %v540 = vpop.f32.mrb[0].mxu0
    %v541 = vadd.f32 %v465, %v540
    %v542 = vpop.f32.mrb[0].mxu0
    %543 = vdwg.mxu0
    %v544 = vmax.f32 %v541, 0.0
    %546 = vrot.lane.b32.xlu0 %v544, 1
    %v547 = vpop.permute.xlu0 %546
    %v549 = vsel %vm61, 0.0, %v547
    %v550 = vmul.f32 %v549, %v67
    %551 = vrot.lane.b32.xlu0 %v544, 127
    %v552 = vpop.permute.xlu0 %551
    %v554 = vsel %vm73, %v552, 0.0
    %v555 = vmul.f32 %v554, %v79
    %v556 = vrot.slane %v544, 4
    %v558 = vsel %vm189, %v550, %v556
    %v559 = vld [vmem:[%s11] sm:$0x3f]
    %v560 = vld [vmem:[%s12] sm:$0x3f]
    %562 = vset.pattern.permute.xlu0 0
    %563 = vperm.xlu0 %562, %v560
    %v564 = vpop.permute.xlu0 %563
    %v567 = vsel %vm198, %v559, 0
    %v570 = vsel %vm189, %v555, 0
    %572 = vmatprep.subr.mxu0 0.0
    %573 = vmatpush1.msra.mxu0 %v558
    %574 = vmatprep.subr.mxu0 0.0
    %575 = vmatpush1.msra.mxu0 %v570
    %576 = vmatprep.subr.mxu0 0.0
    %577 = vmatpush1.msra.mxu0 0.0
    %578 = vmatprep.subr.mxu0 0.0
    %579 = vmatpush1.msra.mxu0 0.0
    %580 = vmatprep.subr.mxu0 0.0
    %581 = vmatpush1.msra.mxu0 0.0
    %582 = vmatprep.subr.mxu0 0.0
    %583 = vmatpush1.msra.mxu0 0.0
    %584 = vmatprep.subr.mxu0 0.0
    %585 = vmatpush1.msra.mxu0 0.0
    %586 = vmatprep.subr.mxu0 0.0
    %587 = vmatpush1.msra.mxu0 0.0
    %588 = vmatprep.subr.mxu0 0.0
    %589 = vmatpush1.msra.mxu0 0.0
    %590 = vmatprep.subr.mxu0 0.0
    %591 = vmatpush1.msra.mxu0 0.0
    %592 = vmatprep.subr.mxu0 0.0
    %593 = vmatpush1.msra.mxu0 0.0
    %594 = vmatprep.subr.mxu0 0.0
    %595 = vmatpush1.msra.mxu0 0.0
    %596 = vmatprep.subr.mxu0 0.0
    %597 = vmatpush1.msra.mxu0 0.0
    %598 = vmatprep.subr.mxu0 0.0
    %599 = vmatpush1.msra.mxu0 0.0
    %600 = vmatprep.subr.mxu0 0.0
    %601 = vmatpush1.msra.mxu0 0.0
    %602 = vmatprep.subr.mxu0 0.0
    %603 = vmatpush1.msra.mxu0 0.0
    %604 = vmatprep.subr.mxu0 0.0
    %605 = vmatpush1.msra.mxu0 0.0
    %606 = vmatprep.subr.mxu0 0.0
    %607 = vmatpush1.msra.mxu0 0.0
    %608 = vmatprep.subr.mxu0 0.0
    %609 = vmatpush1.msra.mxu0 0.0
    %610 = vmatprep.subr.mxu0 0.0
    %611 = vmatpush1.msra.mxu0 0.0
    %612 = vmatprep.subr.mxu0 0.0
    %613 = vmatpush1.msra.mxu0 0.0
    %614 = vmatprep.subr.mxu0 0.0
    %615 = vmatpush1.msra.mxu0 0.0
    %616 = vmatprep.subr.mxu0 0.0
    %617 = vmatpush1.msra.mxu0 0.0
    %618 = vmatprep.subr.mxu0 0.0
    %619 = vmatpush1.msra.mxu0 0.0
    %620 = vmatprep.subr.mxu0 0.0
    %621 = vmatpush1.msra.mxu0 0.0
    %622 = vmatprep.subr.mxu0 0.0
    %623 = vmatpush1.msra.mxu0 0.0
    %624 = vmatprep.subr.mxu0 0.0
    %625 = vmatpush1.msra.mxu0 0.0
    %626 = vmatprep.subr.mxu0 0.0
    %627 = vmatpush1.msra.mxu0 0.0
    %628 = vmatprep.subr.mxu0 0.0
    %629 = vmatpush1.msra.mxu0 0.0
    %630 = vmatprep.subr.mxu0 0.0
    %631 = vmatpush1.msra.mxu0 0.0
    %632 = vmatprep.subr.mxu0 0.0
    %633 = vmatpush1.msra.mxu0 0.0
    %634 = vmatprep.subr.mxu0 0.0
    %635 = vmatpush1.msra.mxu0 0.0
    %636 = vmatprep.mubr.f32.mxu0 0.0
    %637 = vmatmul.mubr.f32.gmra.mrb[0].mxu0 %v567
    %v638 = vpop.f32.mrb[0].mxu0
    %v639 = vadd.f32 %v564, %v638
    %v640 = vpop.f32.mrb[0].mxu0
    %641 = vdwg.mxu0
    %v642 = vmax.f32 %v639, 0.0
    %v644 = vrot.slane %v642, 1
    %645 = vrot.lane.b32.xlu0 %v644, 24
    %v646 = vpop.permute.xlu0 %645
    %v648 = vrot.slane %v642, 2
    %649 = vrot.lane.b32.xlu0 %v648, 48
    %v650 = vpop.permute.xlu0 %649
    %v652 = vrot.slane %v642, 3
    %653 = vrot.lane.b32.xlu0 %v652, 72
    %v654 = vpop.permute.xlu0 %653
    %v656 = vrot.slane %v642, 4
    %657 = vrot.lane.b32.xlu0 %v656, 96
    %v658 = vpop.permute.xlu0 %657
    %v660 = vrot.slane %v642, 5
    %661 = vrot.lane.b32.xlu0 %v660, 120
    %v662 = vpop.permute.xlu0 %661
    %v664 = vsel %vm297, %v642, %v646
    %v665 = vsel %vm299, %v664, %v650
    %v666 = vsel %vm301, %v665, %v654
    %v667 = vsel %vm303, %v666, %v658
    %v668 = vsel %vm305, %v667, %v662
    %669 = vrot.lane.b32.xlu0 %v642, 104
    %v670 = vpop.permute.xlu0 %669
    %673 = vrot.lane.b32.xlu0 %v648, 24
    %v674 = vpop.permute.xlu0 %673
    %676 = vrot.lane.b32.xlu0 %v652, 48
    %v677 = vpop.permute.xlu0 %676
    %679 = vrot.lane.b32.xlu0 %v656, 72
    %v680 = vpop.permute.xlu0 %679
    %682 = vrot.lane.b32.xlu0 %v660, 96
    %v683 = vpop.permute.xlu0 %682
    %v685 = vsel %vm297, %v670, %v644
    %v686 = vsel %vm299, %v685, %v674
    %v687 = vsel %vm301, %v686, %v677
    %v688 = vsel %vm303, %v687, %v680
    %v689 = vsel %vm305, %v688, %v683
    %v691 = vrot.slane %v689, 7
    %v692 = vrot.slane %v683, 7
    %v695 = vsel %vm102, %v668, %v691
    %v696 = vsel %vm102, %v662, %v692
    %v697 = vld [vmem:[%s13] sm:$0xff]
    %v698 = vld [vmem:[%s13 + $0x8] sm:$0xff]
    %v699 = vld [vmem:[%s13 + $0x10] sm:$0xff]
    %v700 = vld [vmem:[%s13 + $0x18] sm:$0xff]
    %v701 = vld [vmem:[%s13 + $0x20] sm:$0xff]
    %v702 = vld [vmem:[%s13 + $0x28] sm:$0xff]
    %v703 = vld [vmem:[%s13 + $0x30] sm:$0xff]
    %v704 = vld [vmem:[%s13 + $0x38] sm:$0xff]
    %v705 = vld [vmem:[%s13 + $0x40] sm:$0xff]
    %v706 = vld [vmem:[%s13 + $0x48] sm:$0xff]
    %v707 = vld [vmem:[%s13 + $0x50] sm:$0xff]
    %v708 = vld [vmem:[%s13 + $0x58] sm:$0xff]
    %v709 = vld [vmem:[%s13 + $0x60] sm:$0xff]
    %v710 = vld [vmem:[%s13 + $0x68] sm:$0xff]
    %v711 = vld [vmem:[%s13 + $0x70] sm:$0xff]
    %v712 = vld [vmem:[%s13 + $0x78] sm:$0xff]
    %v713 = vld [vmem:[%s13 + $0x80] sm:$0xff]
    %v714 = vld [vmem:[%s13 + $0x88] sm:$0xff]
    %v715 = vld [vmem:[%s14] sm:$0x1]
    %v717 = vlaneseq
    %v718 = vshrl.u32 %v717, 7
    %v719 = vsub.s32 0, %v718
    %v720 = vrot.slane %v715, %v719
    %v723 = vsel %vm360, %v696, 0
    %725 = vmatprep.subr.mxu0 0.0
    %726 = vmatpush1.msra.mxu0 %v697
    %727 = vmatprep.subr.mxu0 0.0
    %728 = vmatpush1.msra.mxu0 %v698
    %729 = vmatprep.subr.mxu0 0.0
    %730 = vmatpush1.msra.mxu0 %v699
    %731 = vmatprep.subr.mxu0 0.0
    %732 = vmatpush1.msra.mxu0 %v700
    %733 = vmatprep.subr.mxu0 0.0
    %734 = vmatpush1.msra.mxu0 %v701
    %735 = vmatprep.subr.mxu0 0.0
    %736 = vmatpush1.msra.mxu0 %v702
    %737 = vmatprep.subr.mxu0 0.0
    %738 = vmatpush1.msra.mxu0 %v703
    %739 = vmatprep.subr.mxu0 0.0
    %740 = vmatpush1.msra.mxu0 %v704
    %741 = vmatprep.subr.mxu0 0.0
    %742 = vmatpush1.msra.mxu0 %v705
    %743 = vmatprep.subr.mxu0 0.0
    %744 = vmatpush1.msra.mxu0 %v706
    %745 = vmatprep.subr.mxu0 0.0
    %746 = vmatpush1.msra.mxu0 %v707
    %747 = vmatprep.subr.mxu0 0.0
    %748 = vmatpush1.msra.mxu0 %v708
    %749 = vmatprep.subr.mxu0 0.0
    %750 = vmatpush1.msra.mxu0 %v709
    %751 = vmatprep.subr.mxu0 0.0
    %752 = vmatpush1.msra.mxu0 %v710
    %753 = vmatprep.subr.mxu0 0.0
    %754 = vmatpush1.msra.mxu0 %v711
    %755 = vmatprep.subr.mxu0 0.0
    %756 = vmatpush1.msra.mxu0 %v712
    %757 = vmatprep.subr.mxu0 0.0
    %758 = vmatpush1.msra.mxu0 %v713
    %759 = vmatprep.subr.mxu0 0.0
    %760 = vmatpush1.msra.mxu0 %v714
    %761 = vmatprep.subr.mxu0 0.0
    %762 = vmatpush1.msra.mxu0 0.0
    %763 = vmatprep.subr.mxu0 0.0
    %764 = vmatpush1.msra.mxu0 0.0
    %765 = vmatprep.subr.mxu0 0.0
    %766 = vmatpush1.msra.mxu0 0.0
    %767 = vmatprep.subr.mxu0 0.0
    %768 = vmatpush1.msra.mxu0 0.0
    %769 = vmatprep.subr.mxu0 0.0
    %770 = vmatpush1.msra.mxu0 0.0
    %771 = vmatprep.subr.mxu0 0.0
    %772 = vmatpush1.msra.mxu0 0.0
    %773 = vmatprep.subr.mxu0 0.0
    %774 = vmatpush1.msra.mxu0 0.0
    %775 = vmatprep.subr.mxu0 0.0
    %776 = vmatpush1.msra.mxu0 0.0
    %777 = vmatprep.subr.mxu0 0.0
    %778 = vmatpush1.msra.mxu0 0.0
    %779 = vmatprep.subr.mxu0 0.0
    %780 = vmatpush1.msra.mxu0 0.0
    %781 = vmatprep.subr.mxu0 0.0
    %782 = vmatpush1.msra.mxu0 0.0
    %783 = vmatprep.subr.mxu0 0.0
    %784 = vmatpush1.msra.mxu0 0.0
    %785 = vmatprep.subr.mxu0 0.0
    %786 = vmatpush1.msra.mxu0 0.0
    %787 = vmatprep.subr.mxu0 0.0
    %788 = vmatpush1.msra.mxu0 0.0
    %789 = vmatprep.mubr.f32.mxu0 %v723
    %790 = vmatmul.mubr.f32.gmra.mrb[0].mxu0 %v695
    %v791 = vpop.f32.mrb[0].mxu0
    %v792 = vadd.f32 %v720, %v791
    %v793 = vpop.f32.mrb[0].mxu0
    %794 = vdwg.mxu0
    %795 = vrot.lane.b32.xlu0 %v452, 104
    %v796 = vpop.permute.xlu0 %795
    %v798 = vsel %vm102, %v440, %v796
    %v799 = vadd.f32 %v431, %v792
    %801 = vrot.lane.b32.xlu0 %v799, 104
    %v802 = vpop.permute.xlu0 %801
    %vm804 = vcmask 41984
    %805 = vst.msk [vmem:[#allocation2] sm:$0x3] %vm804, %v802
    %v806 = vsub.f32 %v798, %v792
    %vm807 = vcmask 189440
    %808 = vst.msk [vmem:[#allocation4] sm:$0x3] %vm807, %v806
    // Predicated region
    $region62: #{tpu_custom_call.1} parent=1 // pred_check
      _
    $region63: #{tpu_custom_call.1} parent=1 // pred_check_branch
      %810 = sbr.rel (0) target = $region65
    $region64: #{tpu_custom_call.1} parent=1 // pred_region
      %s812 = ssub.s32 32, 32
      %813 = vsyncadd [#allocation3], %s812
      %s815 = sshll.u32 [#allocation2], 4
      %s816 = int_to_ptr.vmem [resolvable:$true] %s815
      %818 = dma.vmem_to_hbm [thread:$0]  %s816, 32, %s15, [#allocation3]
    $region65: #{tpu_custom_call.1} parent=1 // pred_fallthru
      _
    // Predicated region
    $region66: #{tpu_custom_call.1} parent=1 // pred_check
      _
    $region67: #{tpu_custom_call.1} parent=1 // pred_check_branch
      %820 = sbr.rel (0) target = $region69
    $region68: #{tpu_custom_call.1} parent=1 // pred_region
      %s822 = ssub.s32 32, 32
      %823 = vsyncadd [#allocation5], %s822
      %s825 = sshll.u32 [#allocation4], 4
      %s826 = int_to_ptr.vmem [resolvable:$true] %s825
      %828 = dma.vmem_to_hbm [thread:$0]  %s826, 32, %s16, [#allocation5]
    $region69: #{tpu_custom_call.1} parent=1 // pred_fallthru
      _
    // Predicated region
    $region70: #{tpu_custom_call.1} parent=1 // pred_check
      _
    $region71: #{tpu_custom_call.1} parent=1 // pred_check_branch
      %830 = sbr.rel (0) target = $region73
    $region72: #{tpu_custom_call.1} parent=1 // pred_region
      %831 = dma.done [#allocation3], 32
    $region73: #{tpu_custom_call.1} parent=1 // pred_fallthru
      _
    // Predicated region
    $region74: #{tpu_custom_call.1} parent=1 // pred_check
      _
    $region75: #{tpu_custom_call.1} parent=1 // pred_check_branch
      %833 = sbr.rel (0) target = $region77
    $region76: #{tpu_custom_call.1} parent=1 // pred_region
      %834 = dma.done [#allocation5], 32
    $region77: #{tpu_custom_call.1} parent=1 // pred_fallthru
      _
    %835 = vsyncpa [#allocation3], 1
    %836 = vsyncpa [#allocation5], 1

</llo_original>
